<compile_context>
chip_gen: v6e
topology: v6e:2x2x1
jax: 0.10.0
libtpu: 0.0.40
codegen_flags: <defaults>
</compile_context>

<pallas_src>
import jax
import jax.numpy as jnp
from jax.experimental import pallas as pl
from jax.experimental.pallas import tpu as pltpu


def _conv1x1_lane_dense_kernel(w_ref, b_ref, x_ref, o_ref):
    """1x1 conv + bias for one batch element, spatial dims in the lane axis.

    w_ref: (C_out, C_in)   SMEM   1x1 conv weights
    b_ref: (C_out,)        SMEM   bias
    x_ref: (1, C_in, HWp)  VMEM   zero-padded input, spatial dims flattened
    o_ref: (1, C_out, HWp) VMEM   padded conv output, spatial dims flattened
    """
    C_out, C_in = w_ref.shape
    x = x_ref[0]                                        # (C_in, HWp)
    rows = []
    for co in range(C_out):                             # unrolled at trace time
        acc = b_ref[co] + w_ref[co, 0] * x[0:1, :]       # (1, HWp) on the VPU
        for ci in range(1, C_in):
            acc = acc + w_ref[co, ci] * x[ci:ci + 1, :]
        rows.append(acc)
    o_ref[0] = jnp.concatenate(rows, axis=0)            # one dense (C_out, HWp) store


def conv1x1_padded_pallas(x_nchw, w_oihw, bias):
    """Full Conv2d(C_in->C_out, k=1, stride=1, padding=1), NCHW in / NCHW out."""
    N, C_in, H, W = x_nchw.shape
    C_out = w_oihw.shape[0]
    Hp, Wp = H + 2, W + 2
    HWp = Hp * Wp

    # A 1x1 conv over a zero pixel is exactly the bias, so zero-padding the
    # input and running the pointwise conv over the full padded plane
    # reproduces the padding=1 output everywhere (borders included).  The pad
    # is a few KB here and lets the kernel do only whole-tile, aligned stores.
    x_pad = jnp.pad(x_nchw, ((0, 0), (0, 0), (1, 1), (1, 1)))
    x_flat = x_pad.reshape(N, C_in, HWp)
    w_mat = w_oihw.reshape(C_out, C_in)

    out_flat = pl.pallas_call(
        _conv1x1_lane_dense_kernel,
        out_shape=jax.ShapeDtypeStruct((N, C_out, HWp), jnp.float32),
        grid=(N,),
        in_specs=[
            pl.BlockSpec(memory_space=pltpu.MemorySpace.SMEM),   # weights
            pl.BlockSpec(memory_space=pltpu.MemorySpace.SMEM),   # bias
            pl.BlockSpec((1, C_in, HWp), lambda n: (n, 0, 0)),
        ],
        out_specs=pl.BlockSpec((1, C_out, HWp), lambda n: (n, 0, 0)),
        compiler_params=pltpu.CompilerParams(
            dimension_semantics=("parallel",)),
    )(w_mat, bias, x_flat)
    return out_flat.reshape(N, C_out, Hp, Wp)


def model_forward(x_nchw, w_oihw, bias, *, use_pallas_conv=False):
    """Replicates Model.forward for Conv2d(2, 3, 1, stride=1, padding=1).

    The output v5 only touches padding pixels, which equal the bias, so the
    default path skips the conv entirely (perf review item #1).  Set
    use_pallas_conv=True to run the full lane-dense Pallas conv and slice it.
    """
    N, C_in, H, W = x_nchw.shape
    C_out = w_oihw.shape[0]
    Hp, Wp = H + 2, W + 2

    if use_pallas_conv:
        v1 = conv1x1_padded_pallas(x_nchw, w_oihw, bias)   # (N, C_out, Hp, Wp)
        # v2 = v1 * 0.1 is dead code in the reference module (never used).
        v3 = v1[0, 0, 0, :]                                 # (Wp,)  == bias[0]
        v4 = v1[:, :, 0, 0]                                 # (N, C_out) == bias
    else:
        v3 = jnp.full((Wp,), bias[0], dtype=bias.dtype)
        v4 = jnp.broadcast_to(bias, (N, C_out))

    # TODO(synk): torch.cat((v3, v4), dim=0) is ill-formed in PyTorch (1-D vs
    # 2-D operands); we concatenate v3 with v4 flattened row-major instead.
    return jnp.concatenate([v3, v4.reshape(-1)], axis=0)


if __name__ == "__main__":
    key = jax.random.PRNGKey(0)
    kx, kw, kb = jax.random.split(key, 3)

    N, C_in, H, W = 2, 2, 16, 16
    C_out = 3

    x = jax.random.normal(kx, (N, C_in, H, W), dtype=jnp.float32)
    # Deterministic synthetic parameters (Conv2d(2, 3, 1) shapes).
    w = jax.random.normal(kw, (C_out, C_in, 1, 1), dtype=jnp.float32) * 0.5
    b = jax.random.normal(kb, (C_out,), dtype=jnp.float32) * 0.1

    # Default fast path (conv eliminated) and the Pallas conv path.
    out_fast = model_forward(x, w, b)
    out_pallas = model_forward(x, w, b, use_pallas_conv=True)
    jax.block_until_ready((out_fast, out_pallas))

    # Plain-JAX reference: full conv via lax, then identical slicing/concat.
    y_ref = jax.lax.conv_general_dilated(
        x, w, window_strides=(1, 1), padding=((1, 1), (1, 1)),
        dimension_numbers=("NCHW", "OIHW", "NCHW"),
    ) + b.reshape(1, C_out, 1, 1)
    ref = jnp.concatenate(
        [y_ref[0, 0, 0, :], y_ref[:, :, 0, 0].reshape(-1)], axis=0)

    assert out_fast.shape == (W + 2 + N * C_out,)
    assert jnp.allclose(out_fast, ref, atol=1e-5), "fast path mismatch"
    assert jnp.allclose(out_pallas, ref, atol=1e-5), "pallas path mismatch"

    # Also verify the full conv output produced by the Pallas kernel.
    y_pallas = conv1x1_padded_pallas(x, w, b)
    assert jnp.allclose(y_pallas, y_ref, atol=1e-5), "conv output mismatch"

    print("KERNEL_OK")
</pallas_src>

<mosaic_0001>
module attributes {stable_mosaic.version = 11 : i64} {
  func.func @_conv1x1_lane_dense_kernel(%arg0: i32, %arg1: memref<3x2xf32, #tpu.memory_space<smem>>, %arg2: memref<3xf32, #tpu.memory_space<smem>>, %arg3: memref<1x2x324xf32, #tpu.memory_space<vmem>>, %arg4: memref<1x3x324xf32, #tpu.memory_space<vmem>>) attributes {dimension_semantics = [#tpu.dimension_semantics<parallel>], iteration_bounds = array<i64: 2>, scalar_prefetch = 0 : i64, scratch_operands = 0 : i64, tpu.core_type = #tpu.core_type<tc>, window_params = [{transform_indices = @transform_0, window_bounds = array<i64: 3, 2>}, {transform_indices = @transform_1, window_bounds = array<i64: 3>}, {transform_indices = @transform_2, window_bounds = array<i64: 1, 2, 324>}, {transform_indices = @transform_3, window_bounds = array<i64: 1, 3, 324>}]} {
    %c0 = arith.constant 0 : index
    %c0_0 = arith.constant 0 : index
    %c0_1 = arith.constant 0 : index
    %0 = vector.load %arg3[%c0, %c0_0, %c0_1] : memref<1x2x324xf32, #tpu.memory_space<vmem>>, vector<1x2x324xf32>
    %1 = vector.shape_cast %0 : vector<1x2x324xf32> to vector<2x324xf32>
    %c0_2 = arith.constant 0 : index
    %2 = memref.load %arg2[%c0_2] : memref<3xf32, #tpu.memory_space<smem>>
    %c0_3 = arith.constant 0 : index
    %c0_4 = arith.constant 0 : index
    %3 = memref.load %arg1[%c0_3, %c0_4] : memref<3x2xf32, #tpu.memory_space<smem>>
    %4 = vector.extract_strided_slice %1 {offsets = [0, 0], sizes = [1, 324], strides = [1, 1]} : vector<2x324xf32> to vector<1x324xf32>
    %5 = vector.broadcast %3 : f32 to vector<1x324xf32>
    %6 = arith.mulf %5, %4 : vector<1x324xf32>
    %7 = vector.broadcast %2 : f32 to vector<1x324xf32>
    %8 = arith.addf %7, %6 : vector<1x324xf32>
    %c0_5 = arith.constant 0 : index
    %c1 = arith.constant 1 : index
    %9 = memref.load %arg1[%c0_5, %c1] : memref<3x2xf32, #tpu.memory_space<smem>>
    %10 = vector.extract_strided_slice %1 {offsets = [1, 0], sizes = [1, 324], strides = [1, 1]} : vector<2x324xf32> to vector<1x324xf32>
    %11 = vector.broadcast %9 : f32 to vector<1x324xf32>
    %12 = arith.mulf %11, %10 : vector<1x324xf32>
    %13 = arith.addf %8, %12 : vector<1x324xf32>
    %c1_6 = arith.constant 1 : index
    %14 = memref.load %arg2[%c1_6] : memref<3xf32, #tpu.memory_space<smem>>
    %c1_7 = arith.constant 1 : index
    %c0_8 = arith.constant 0 : index
    %15 = memref.load %arg1[%c1_7, %c0_8] : memref<3x2xf32, #tpu.memory_space<smem>>
    %16 = vector.extract_strided_slice %1 {offsets = [0, 0], sizes = [1, 324], strides = [1, 1]} : vector<2x324xf32> to vector<1x324xf32>
    %17 = vector.broadcast %15 : f32 to vector<1x324xf32>
    %18 = arith.mulf %17, %16 : vector<1x324xf32>
    %19 = vector.broadcast %14 : f32 to vector<1x324xf32>
    %20 = arith.addf %19, %18 : vector<1x324xf32>
    %c1_9 = arith.constant 1 : index
    %c1_10 = arith.constant 1 : index
    %21 = memref.load %arg1[%c1_9, %c1_10] : memref<3x2xf32, #tpu.memory_space<smem>>
    %22 = vector.extract_strided_slice %1 {offsets = [1, 0], sizes = [1, 324], strides = [1, 1]} : vector<2x324xf32> to vector<1x324xf32>
    %23 = vector.broadcast %21 : f32 to vector<1x324xf32>
    %24 = arith.mulf %23, %22 : vector<1x324xf32>
    %25 = arith.addf %20, %24 : vector<1x324xf32>
    %c2 = arith.constant 2 : index
    %26 = memref.load %arg2[%c2] : memref<3xf32, #tpu.memory_space<smem>>
    %c2_11 = arith.constant 2 : index
    %c0_12 = arith.constant 0 : index
    %27 = memref.load %arg1[%c2_11, %c0_12] : memref<3x2xf32, #tpu.memory_space<smem>>
    %28 = vector.extract_strided_slice %1 {offsets = [0, 0], sizes = [1, 324], strides = [1, 1]} : vector<2x324xf32> to vector<1x324xf32>
    %29 = vector.broadcast %27 : f32 to vector<1x324xf32>
    %30 = arith.mulf %29, %28 : vector<1x324xf32>
    %31 = vector.broadcast %26 : f32 to vector<1x324xf32>
    %32 = arith.addf %31, %30 : vector<1x324xf32>
    %c2_13 = arith.constant 2 : index
    %c1_14 = arith.constant 1 : index
    %33 = memref.load %arg1[%c2_13, %c1_14] : memref<3x2xf32, #tpu.memory_space<smem>>
    %34 = vector.extract_strided_slice %1 {offsets = [1, 0], sizes = [1, 324], strides = [1, 1]} : vector<2x324xf32> to vector<1x324xf32>
    %35 = vector.broadcast %33 : f32 to vector<1x324xf32>
    %36 = arith.mulf %35, %34 : vector<1x324xf32>
    %37 = arith.addf %32, %36 : vector<1x324xf32>
    %38 = tpu.concatenate %13, %25, %37 in 0 : vector<1x324xf32>, vector<1x324xf32>, vector<1x324xf32> -> vector<3x324xf32>
    %c0_15 = arith.constant 0 : index
    %c0_16 = arith.constant 0 : index
    %c0_17 = arith.constant 0 : index
    %39 = vector.load %arg4[%c0_15, %c0_16, %c0_17] : memref<1x3x324xf32, #tpu.memory_space<vmem>>, vector<1x3x324xf32>
    %40 = vector.shape_cast %39 : vector<1x3x324xf32> to vector<3x324xf32>
    %41 = vector.shape_cast %38 : vector<3x324xf32> to vector<1x3x324xf32>
    tpu.vector_store %arg4[%c0_15, %c0_16, %c0_17], %41 {strides = array<i32>} : memref<1x3x324xf32, #tpu.memory_space<vmem>>, vector<1x3x324xf32>,
    return
  }
  func.func @transform_0(%arg0: i32) -> (i32, i32) {
    %c0_i32 = arith.constant 0 : i32
    %c0_i32_0 = arith.constant 0 : i32
    %c0_i32_1 = arith.constant 0 : i32
    return %c0_i32, %c0_i32_0 : i32, i32
  }
  func.func @transform_1(%arg0: i32) -> i32 {
    %c0_i32 = arith.constant 0 : i32
    %c0_i32_0 = arith.constant 0 : i32
    return %c0_i32 : i32
  }
  func.func @transform_2(%arg0: i32) -> (i32, i32, i32) {
    %c0_i32 = arith.constant 0 : i32
    %c0_i32_0 = arith.constant 0 : i32
    %c0_i32_1 = arith.constant 0 : i32
    return %arg0, %c0_i32, %c0_i32_0 : i32, i32, i32
  }
  func.func @transform_3(%arg0: i32) -> (i32, i32, i32) {
    %c0_i32 = arith.constant 0 : i32
    %c0_i32_0 = arith.constant 0 : i32
    %c0_i32_1 = arith.constant 0 : i32
    return %arg0, %c0_i32, %c0_i32_0 : i32, i32, i32
  }
}

</mosaic_0001>

<llo_original>
// kernel: tpu_custom_call.1
$region0: #{tpu_custom_call.1}
  #allocation0 [shape = 'u32[]', space=smem, size = 0x4, offset = 0x4, fixed_abs, tag = 'smem constant byte address 0x4 - core index']
  #allocation1 [shape = 'u32[144,128]{1,0:T(1,128)}', space=vmem, size = 0x12000, scoped, tag = 'internal scratch']
  %s0 = inlined_call_operand.vmem [shape: f32[3,2], index: 0, kind: input, shape index: {}]
  %s1 = inlined_call_operand.vmem [shape: f32[3], index: 1, kind: input, shape index: {}]
  %s2 = inlined_call_operand.hbm [shape: f32[2,2,324], index: 2, kind: input, shape index: {}]
  %s3 = inlined_call_operand.vmem [shape: f32[2,3,324], index: 3, kind: output, shape index: {}]
  %s4 = sld [smem:[#allocation0]]
  $region57: #{tpu_custom_call.1} parent=0
    _
  %s6 = ssub.s32 1, %s4
  %s7 = scalar_select 0, %s6, %s4
  $region1: #{tpu_custom_call.1} parent=0
    #allocation2 [shape = 'u8[2048]{0}', space=smem, size = 0x800, scoped, tag = 'input window, operand 0, single buffered']
    #allocation3 [shape = 's32[2]{0}', space=sflag, size = 0x8, scoped, tag = 'scoped memory for tpu_custom_call.1']
    #allocation4 [shape = 's32[2]{0}', space=sflag, size = 0x8, scoped, tag = 'scoped memory for tpu_custom_call.1']
    #allocation5 [shape = 'u8[512]{0}', space=smem, size = 0x200, scoped, tag = 'input window, operand 1, single buffered']
    #allocation6 [shape = 's32[1]{0}', space=sflag, size = 0x4, scoped, tag = 'scoped memory for tpu_custom_call.1']
    #allocation7 [shape = 'u8[6144]{0}', space=vmem, size = 0x1800, scoped, tag = 'input window, operand 2']
    %8 = vsyncpa [#allocation4], 0
    %9 = vsyncpa [#allocation6], 0
    %10 = vsyncpa [#allocation3], 0
    %s11 = scalar_lea.sflag [#allocation3], 1
    %12 = vsyncpa %s11, 0
    loop: start=0, step=1, limit=4
    $region2: #{tpu_custom_call.1} parent=1 // loop_pre_header
      _
    $region3: #{tpu_custom_call.1} parent=1 // loop_header
      %s14 = sphi 0, %s18
      %p15 = scmp.ge.s32.totalorder %s14, 4
      %s22 = sphi 0, %s22
      %s24 = sphi 0, %s22
      %s25 = sphi 0, %s24
      %s39 = sphi 0, %s25
      %s43 = sphi 0, %s43
      %s45 = sphi 0, %s43
      %s46 = sphi 0, %s45
      %s60 = sphi 0, %s46
      %s66 = sphi 0, %s68
      %s69 = sphi 0, %s66
      %s70 = sphi 0, %s69
      %s86 = sphi 0, %s70
      %s92 = sphi 0, %s94
      %s95 = sphi 0, %s92
      %s96 = sphi 0, %s95
      %s112 = sphi 0, %s96
    $region4: #{tpu_custom_call.1} parent=1 // loop_header_branch
      %17 = sbr.rel (%p15) target = $region8
    $region5: #{tpu_custom_call.1} parent=1 // loop_body
      %s19 = ssub.s32 %s14, 1
      %s20 = ssub.s32 %s14, 2
      %s21 = sadd.s32 %s14, 1
      %s23 = sadd.s32 %s22, 1
      %p26 = scmp.eq.s32.totalorder %s14, 1
      %p27 = scmp.ne.s32.totalorder %s22, %s24
      %p28 = scmp.eq.s32.totalorder %s14, 0
      %p29 = por %p27, %p28
      %p30 = scmp.ne.s32.totalorder %s22, %s24
      %p31 = scmp.eq.s32.totalorder %s19, 1
      %p32 = por %p30, %p31
      %p33 = scmp.ne.s32.totalorder %s24, %s25
      %p34 = scmp.eq.s32.totalorder %s19, 0
      %p35 = por %p33, %p34
      %p36 = scmp.ne.s32.totalorder %s24, %s25
      %p37 = scmp.eq.s32.totalorder %s20, 1
      %p38 = por %p36, %p37
      %p40 = scmp.ne.s32.totalorder %s25, %s39
      %p41 = scmp.eq.s32.totalorder %s20, 0
      %p42 = por %p40, %p41
      %s44 = sadd.s32 %s43, 1
      %p47 = scmp.eq.s32.totalorder %s14, 1
      %p48 = scmp.ne.s32.totalorder %s43, %s45
      %p49 = scmp.eq.s32.totalorder %s14, 0
      %p50 = por %p48, %p49
      %p51 = scmp.ne.s32.totalorder %s43, %s45
      %p52 = scmp.eq.s32.totalorder %s19, 1
      %p53 = por %p51, %p52
      %p54 = scmp.ne.s32.totalorder %s45, %s46
      %p55 = scmp.eq.s32.totalorder %s19, 0
      %p56 = por %p54, %p55
      %p57 = scmp.ne.s32.totalorder %s45, %s46
      %p58 = scmp.eq.s32.totalorder %s20, 1
      %p59 = por %p57, %p58
      %p61 = scmp.ne.s32.totalorder %s46, %s60
      %p62 = scmp.eq.s32.totalorder %s20, 0
      %p63 = por %p61, %p62
      %s64 = ssub.s32 %s14, %s21
      %p65 = scmp.eq.s32.totalorder %s64, 0
      %s67 = sadd.s32 %s66, 1
      %s68 = scalar_select %p65, %s66, %s67
      %p71 = pneg %p65
      %p72 = scmp.eq.s32.totalorder %s14, 1
      %p73 = por %p71, %p72
      %p74 = scmp.ne.s32.totalorder %s66, %s69
      %p75 = scmp.eq.s32.totalorder %s14, 0
      %p76 = por %p74, %p75
      %p77 = scmp.ne.s32.totalorder %s66, %s69
      %p78 = scmp.eq.s32.totalorder %s19, 1
      %p79 = por %p77, %p78
      %p80 = scmp.ne.s32.totalorder %s69, %s70
      %p81 = scmp.eq.s32.totalorder %s19, 0
      %p82 = por %p80, %p81
      %p83 = scmp.ne.s32.totalorder %s69, %s70
      %p84 = scmp.eq.s32.totalorder %s20, 1
      %p85 = por %p83, %p84
      %p87 = scmp.ne.s32.totalorder %s70, %s86
      %p88 = scmp.eq.s32.totalorder %s20, 0
      %p89 = por %p87, %p88
      %s90 = ssub.s32 %s14, %s21
      %p91 = scmp.eq.s32.totalorder %s90, 0
      %s93 = sadd.s32 %s92, 1
      %s94 = scalar_select %p91, %s92, %s93
      %p97 = pneg %p91
      %p98 = scmp.eq.s32.totalorder %s14, 1
      %p99 = por %p97, %p98
      %p100 = scmp.ne.s32.totalorder %s92, %s95
      %p101 = scmp.eq.s32.totalorder %s14, 0
      %p102 = por %p100, %p101
      %p103 = scmp.ne.s32.totalorder %s92, %s95
      %p104 = scmp.eq.s32.totalorder %s19, 1
      %p105 = por %p103, %p104
      %p106 = scmp.ne.s32.totalorder %s95, %s96
      %p107 = scmp.eq.s32.totalorder %s19, 0
      %p108 = por %p106, %p107
      %p109 = scmp.ne.s32.totalorder %s95, %s96
      %p110 = scmp.eq.s32.totalorder %s20, 1
      %p111 = por %p109, %p110
      %p113 = scmp.ne.s32.totalorder %s96, %s112
      %p114 = scmp.eq.s32.totalorder %s20, 0
      %p115 = por %p113, %p114
      %p116 = scmp.le.s32.totalorder 1, %s14
      %p117 = scmp.lt.s32.totalorder %s14, 3
      %p118 = pnand %p116, %p117
      %p119 = pneg %p118
      // Predicated region
      $region9: #{tpu_custom_call.1} parent=5 // pred_check
        _
      $region10: #{tpu_custom_call.1} parent=5 // pred_check_branch
        %121 = sbr.rel (%p118) target = $region12
      $region11: #{tpu_custom_call.1} parent=5 // pred_region
        %s122 = ssub.s32 %s14, 1
        // Predicated region
        $region13: #{tpu_custom_call.1} parent=11 // pred_check
          %p123 = pneg %p35
        $region14: #{tpu_custom_call.1} parent=11 // pred_check_branch
          %125 = sbr.rel (%p123) target = $region16
        $region15: #{tpu_custom_call.1} parent=11 // pred_region
          %s127 = ssub.s32 64, 64
          %128 = vsyncadd [#allocation4], %s127
          %s130 = sshll.u32 %s0, 4
          %s131 = int_to_ptr.vmem [resolvable:$true] %s130
          %133 = dma.vmem_to_smem %s131, 64, [#allocation2], [#allocation4]
        $region16: #{tpu_custom_call.1} parent=11 // pred_fallthru
          _
        // Predicated region
        $region17: #{tpu_custom_call.1} parent=11 // pred_check
          %p134 = pneg %p56
        $region18: #{tpu_custom_call.1} parent=11 // pred_check_branch
          %136 = sbr.rel (%p134) target = $region20
        $region19: #{tpu_custom_call.1} parent=11 // pred_region
          %s138 = ssub.s32 16, 16
          %139 = vsyncadd [#allocation6], %s138
          %s141 = sshll.u32 %s1, 4
          %s142 = int_to_ptr.vmem [resolvable:$true] %s141
          %144 = dma.vmem_to_smem %s142, 16, [#allocation5], [#allocation6]
        $region20: #{tpu_custom_call.1} parent=11 // pred_fallthru
          _
      $region12: #{tpu_custom_call.1} parent=5 // pred_fallthru
        _
      %p145 = scmp.lt.s32.totalorder %s14, 2
      // Predicated region
      $region21: #{tpu_custom_call.1} parent=5 // pred_check
        %p146 = pneg %p145
      $region22: #{tpu_custom_call.1} parent=5 // pred_check_branch
        %148 = sbr.rel (%p146) target = $region24
      $region23: #{tpu_custom_call.1} parent=5 // pred_region
        // Predicated region
        $region25: #{tpu_custom_call.1} parent=23 // pred_check
          %p149 = pneg %p76
        $region26: #{tpu_custom_call.1} parent=23 // pred_check_branch
          %151 = sbr.rel (%p149) target = $region28
        $region27: #{tpu_custom_call.1} parent=23 // pred_region
          %s152 = sand.u32 %s66, 1
          %s153 = scalar_lea.sflag [#allocation3], %s152
          %s154 = sand.u32 %s66, 1
          %s155 = smul.addr %s154, 6
          %s156 = scalar_lea.vmem [#allocation7], %s155
          %s158 = ssub.s32 96, 96
          %159 = vsyncadd %s153, %s158
          %s160 = smul.addr %s14, 3
          %s161 = smul.addr %s160, 32
          %s162 = scalar_lea.hbm %s2, %s161
          %s164 = sshll.u32 %s156, 4
          %s165 = int_to_ptr.vmem [resolvable:$true] %s164
          %167 = dma.hbm_to_vmem [thread:$0]  %s162, 96, %s165, %s153
        $region28: #{tpu_custom_call.1} parent=23 // pred_fallthru
          _
      $region24: #{tpu_custom_call.1} parent=5 // pred_fallthru
        _
      %p168 = scmp.le.s32.totalorder 1, %s14
      %p169 = scmp.lt.s32.totalorder %s14, 3
      %p170 = pnand %p168, %p169
      %p171 = pneg %p170
      // Predicated region
      $region29: #{tpu_custom_call.1} parent=5 // pred_check
        _
      $region30: #{tpu_custom_call.1} parent=5 // pred_check_branch
        %173 = sbr.rel (%p170) target = $region32
      $region31: #{tpu_custom_call.1} parent=5 // pred_region
        %s174 = ssub.s32 %s14, 1
        // Predicated region
        $region33: #{tpu_custom_call.1} parent=31 // pred_check
          %p175 = pneg %p35
        $region34: #{tpu_custom_call.1} parent=31 // pred_check_branch
          %177 = sbr.rel (%p175) target = $region36
        $region35: #{tpu_custom_call.1} parent=31 // pred_region
          %178 = dma.done [#allocation4], 64
        $region36: #{tpu_custom_call.1} parent=31 // pred_fallthru
          _
        // Predicated region
        $region37: #{tpu_custom_call.1} parent=31 // pred_check
          %p179 = pneg %p56
        $region38: #{tpu_custom_call.1} parent=31 // pred_check_branch
          %181 = sbr.rel (%p179) target = $region40
        $region39: #{tpu_custom_call.1} parent=31 // pred_region
          %182 = dma.done [#allocation6], 16
        $region40: #{tpu_custom_call.1} parent=31 // pred_fallthru
          _
        %s183 = sand.u32 %s69, 1
        %s184 = scalar_lea.sflag [#allocation3], %s183
        %s185 = sand.u32 %s69, 1
        %s186 = smul.addr %s185, 6
        %s187 = scalar_lea.vmem [#allocation7], %s186
        // Predicated region
        $region41: #{tpu_custom_call.1} parent=31 // pred_check
          %p188 = pneg %p82
        $region42: #{tpu_custom_call.1} parent=31 // pred_check_branch
          %190 = sbr.rel (%p188) target = $region44
        $region43: #{tpu_custom_call.1} parent=31 // pred_region
          %191 = dma.done %s184, 96
        $region44: #{tpu_custom_call.1} parent=31 // pred_fallthru
          _
        %192 = sfence
        %p193 = pneg %p35
        %p194 = pneg %p32
        %p195 = pneg %p56
        %p196 = pneg %p53
        %s197 = sand.u32 %s69, 1
        %s198 = scalar_lea.sflag [#allocation3], %s197
        %s199 = sand.u32 %s69, 1
        %s200 = smul.addr %s199, 6
        %s201 = scalar_lea.vmem [#allocation7], %s200
        %p202 = pneg %p82
        %p203 = pneg %p79
        %p204 = pneg %p108
        %p205 = pneg %p105
        %p206 = scmp.lt.s32.totalorder %s19, 1
        %s207 = scalar_select %p206, %s19, 1
        %s208 = smul.addr %s207, 3
        %s209 = smul.addr %s208, 4
        %s210 = scalar_lea.vmem %s3, %s209
        %p211 = scmp.lt.s32.totalorder %s19, 1
        %s212 = scalar_select %p211, %s19, 1
        %s213 = smul.addr %s212, 3
        %s214 = smul.addr %s213, 4
        %s215 = scalar_lea.vmem %s3, %s214
        %v216 = vld [vmem:[%s187] sm:$0x3f]
        %s217 = sld [smem:[#allocation5]]
        %s218 = sld [smem:[#allocation2]]
        %v219 = vstv %s218
        %v220 = vmul.f32 %v219, %v216
        %v221 = vstv %s217
        %v222 = vadd.f32 %v221, %v220
        %s223 = sld [smem:[#allocation2 + $0x1]]
        %v224 = vstv %s223
        %v225 = vmul.f32 %v224, %v216
        %v227 = vrot.slane %v225, 7
        %v228 = vrot.slane %v227, 2
        %v230 = vadd.f32 %v222, %v228
        %s231 = sld [smem:[#allocation5 + $0x1]]
        %s232 = sld [smem:[#allocation2 + $0x80]]
        %v233 = vstv %s232
        %v234 = vmul.f32 %v233, %v216
        %v235 = vstv %s231
        %v236 = vadd.f32 %v235, %v234
        %s237 = sld [smem:[#allocation2 + $0x81]]
        %v238 = vstv %s237
        %v239 = vmul.f32 %v238, %v216
        %v241 = vrot.slane %v239, 7
        %v242 = vrot.slane %v241, 2
        %v244 = vadd.f32 %v236, %v242
        %s245 = sld [smem:[#allocation5 + $0x2]]
        %s246 = sld [smem:[#allocation2 + $0x100]]
        %v247 = vstv %s246
        %v248 = vmul.f32 %v247, %v216
        %v249 = vstv %s245
        %v250 = vadd.f32 %v249, %v248
        %s251 = sld [smem:[#allocation2 + $0x101]]
        %v252 = vstv %s251
        %v253 = vmul.f32 %v252, %v216
        %v255 = vrot.slane %v253, 7
        %v256 = vrot.slane %v255, 2
        %v258 = vadd.f32 %v250, %v256
        %v260 = vlaneseq
        %v261 = vshrl.u32 %v260, 7
        %v262 = vsub.s32 0, %v261
        %v263 = vrot.slane %v230, %v262
        %v264 = vlaneseq
        %v265 = vshrl.u32 %v264, 7
        %v266 = vsub.s32 2, %v265
        %v267 = vrot.slane %v230, %v266
        %v268 = vlaneseq
        %v269 = vshrl.u32 %v268, 7
        %v270 = vsub.s32 4, %v269
        %v271 = vrot.slane %v230, %v270
        %v276 = vlaneseq
        %v277 = vshrl.u32 %v276, 7
        %v278 = vsub.s32 0, %v277
        %v279 = vrot.slane %v244, %v278
        %v280 = vlaneseq
        %v281 = vshrl.u32 %v280, 7
        %v282 = vsub.s32 2, %v281
        %v283 = vrot.slane %v244, %v282
        %v284 = vlaneseq
        %v285 = vshrl.u32 %v284, 7
        %v286 = vsub.s32 4, %v285
        %v287 = vrot.slane %v244, %v286
        %v292 = vlaneseq
        %v293 = vshrl.u32 %v292, 7
        %v294 = vsub.s32 0, %v293
        %v295 = vrot.slane %v258, %v294
        %v296 = vlaneseq
        %v297 = vshrl.u32 %v296, 7
        %v298 = vsub.s32 2, %v297
        %v299 = vrot.slane %v258, %v298
        %v300 = vlaneseq
        %v301 = vshrl.u32 %v300, 7
        %v302 = vsub.s32 4, %v301
        %v303 = vrot.slane %v258, %v302
        %vm307 = vcmask 1040384
        %v308 = vsel %vm307, %v263, %v279
        %v309 = vsel %vm307, %v267, %v283
        %v310 = vsel %vm307, %v271, %v287
        %vm311 = vcmask 1041408
        %v312 = vsel %vm311, %v308, %v295
        %v313 = vsel %vm311, %v309, %v299
        %v314 = vsel %vm311, %v310, %v303
        %v317 = vcombine.low %v312, %v313
        %319 = vst [vmem:[%s215] sm:$0x77] %v317
        %vm320 = vcmask 550912
        %321 = vst.msk [vmem:[%s215 + $0x8] sm:$0x7] %vm320, %v314
        %p322 = scmp.lt.s32.totalorder %s19, 1
        %s323 = scalar_select %p322, %s19, 1
        %s324 = smul.addr %s323, 3
        %s325 = smul.addr %s324, 4
        %s326 = scalar_lea.vmem %s3, %s325
        // Predicated region
        $region45: #{tpu_custom_call.1} parent=31 // pred_check
          %p327 = pneg %p105
        $region46: #{tpu_custom_call.1} parent=31 // pred_check_branch
          %329 = sbr.rel (%p327) target = $region48
        $region47: #{tpu_custom_call.1} parent=31 // pred_region
          _
        $region48: #{tpu_custom_call.1} parent=31 // pred_fallthru
          _
      $region32: #{tpu_custom_call.1} parent=5 // pred_fallthru
        _
      %p330 = scmp.le.s32.totalorder 2, %s14
      // Predicated region
      $region49: #{tpu_custom_call.1} parent=5 // pred_check
        %p331 = pneg %p330
      $region50: #{tpu_custom_call.1} parent=5 // pred_check_branch
        %333 = sbr.rel (%p331) target = $region52
      $region51: #{tpu_custom_call.1} parent=5 // pred_region
        %s334 = ssub.s32 %s14, 2
        // Predicated region
        $region53: #{tpu_custom_call.1} parent=51 // pred_check
          %p335 = pneg %p111
        $region54: #{tpu_custom_call.1} parent=51 // pred_check_branch
          %337 = sbr.rel (%p335) target = $region56
        $region55: #{tpu_custom_call.1} parent=51 // pred_region
          %p338 = scmp.lt.s32.totalorder %s20, 1
          %s339 = scalar_select %p338, %s20, 1
          %s340 = smul.addr %s339, 3
          %s341 = smul.addr %s340, 4
          %s342 = scalar_lea.vmem %s3, %s341
        $region56: #{tpu_custom_call.1} parent=51 // pred_fallthru
          _
      $region52: #{tpu_custom_call.1} parent=5 // pred_fallthru
        _
    $region6: #{tpu_custom_call.1} parent=1 // loop_footer
      %s18 = sadd.s32 1, %s14
    $region7: #{tpu_custom_call.1} parent=1 // loop_footer_branch
      %13 = sbr.rel target = $region3
    $region8: #{tpu_custom_call.1} parent=1 // loop_exit
      _
    %343 = vsyncpa [#allocation3], 1
    %s344 = scalar_lea.sflag [#allocation3], 1
    %345 = vsyncpa %s344, 1
    %346 = vsyncpa [#allocation4], 1
    %s347 = scalar_lea.sflag [#allocation4], 1
    %348 = vsyncpa %s347, 1
    %349 = vsyncpa [#allocation6], 1

</llo_original>
